<compile_context>
chip_gen: v6e
topology: v6e:2x2x1
jax: 0.10.0
libtpu: 0.0.40
codegen_flags: <defaults>
</compile_context>

<pallas_src>
import functools
import math

import jax
import jax.numpy as jnp
from jax import lax
from jax.experimental import pallas as pl
from jax.experimental.pallas import tpu as pltpu
import numpy as np


# ----------------------------- Pallas kernel (CAM head) ---------------------
def cam_head_kernel(feat_ref, w_ref, out_ref, acc_ref):
    """One channel-slab step of the CAM-head reduction.

    feat_ref: (2, TILE_C, HW)  NCHW features (spatial flattened, whole map)
    w_ref:    (1, TILE_C)      classifier 1x1 conv weight slab
    out_ref:  (2, HW) f32      relu(conv1x1(feat)) per batch element
    acc_ref:  (2, HW) f32      VMEM accumulator, persistent across grid steps
    """
    k = pl.program_id(0)

    @pl.when(k == 0)
    def _init():
        acc_ref[...] = jnp.zeros_like(acc_ref)

    w = w_ref[...]                                                    # (1, TILE_C)
    # 1x1 conv == channel contraction -> one lane-dense MXU matmul per batch
    # element, f32 accumulation.  (M=1 MXU shape is deliberate: roofline is
    # HBM-bound; MXU is idle slack.)
    acc_ref[0:1, :] += jnp.dot(w, feat_ref[0],
                               preferred_element_type=jnp.float32)    # (1, HW)
    acc_ref[1:2, :] += jnp.dot(w, feat_ref[1],
                               preferred_element_type=jnp.float32)    # (1, HW)

    @pl.when(k == pl.num_programs(0) - 1)
    def _finalize():
        out_ref[...] = jnp.maximum(acc_ref[...], 0.0)                 # F.relu


def _pick_tile_c(C, HW, itemsize, budget_bytes):
    """Largest channel slab TILE_C such that:
       - TILE_C divides C,
       - TILE_C is a multiple of 128 (lane-dense weight block) or equals C,
       - the double-buffered feature slab 2(batch) x 2(buffers) x TILE_C x HW
         x itemsize stays under budget_bytes,
       - and (when possible) C // TILE_C >= 2 so the grid has multiple steps
         and the DMA of slab k+1 overlaps compute on slab k."""
    max_tc = max(1, budget_bytes // (2 * 2 * HW * itemsize))
    cands = [t for t in range(128, C + 1, 128) if C % t == 0]
    for prefer_multi_step in (True, False):
        best = None
        for t in cands:
            if t > max_tc:
                continue
            if prefer_multi_step and (C // t) < 2:
                continue
            best = t if best is None else max(best, t)
        if best is not None:
            return best
    # No 128-multiple divisor of C fits the budget: fall back to the whole C
    # axis in one slab (always a legal block shape; single grid step).
    return C


def cam_head(feat_nchw, cls_weight, *, tile_c=None,
             vmem_budget_bytes=24 << 20, vmem_limit_bytes=32 << 20):
    """feat_nchw: (2, C, H, W) (f32 or bf16), cls_weight: (1, C, 1, 1).

    Returns x[0] + x[1].flip(-1) of relu(conv1x1(feat)), shape (1, H, W), f32.
    """
    B, C, H, W = feat_nchw.shape
    assert B == 2, "CAM.forward indexes x[0] and x[1]; batch must be 2"
    HW = H * W

    # Free reshape for a row-major NCHW array: channels on sublanes, spatial on
    # lanes.  No transpose, no dtype cast, no extra HBM materialization.
    feat_flat = feat_nchw.reshape(B, C, HW)
    w2d = cls_weight.reshape(1, C).astype(feat_nchw.dtype)

    itemsize = int(jnp.dtype(feat_flat.dtype).itemsize)
    if tile_c is None:
        tile_c = _pick_tile_c(C, HW, itemsize, vmem_budget_bytes)
    assert C % tile_c == 0, "TILE_C must divide C"
    assert tile_c % 128 == 0 or tile_c == C, \
        "TILE_C must be a multiple of 128 (weight lane dim) or equal C"
    grid = (C // tile_c,)

    cost = pl.CostEstimate(
        flops=2 * B * HW * C,                       # 2 flops/MAC, 2 batch elems
        transcendentals=0,
        bytes_accessed=B * C * HW * itemsize + C * itemsize + B * HW * 4,
    )

    cams_flat = pl.pallas_call(
        cam_head_kernel,
        out_shape=jax.ShapeDtypeStruct((B, HW), jnp.float32),
        grid=grid,
        in_specs=[
            # Feature slab: whole batch + spatial, TILE_C channels per step.
            pl.BlockSpec((B, tile_c, HW), lambda k: (0, k, 0)),
            # Matching weight slab (tiny).
            pl.BlockSpec((1, tile_c), lambda k: (0, k)),
        ],
        # Same output block across the reduction axis -> resident, stored once.
        out_specs=pl.BlockSpec((B, HW), lambda k: (0, 0)),
        scratch_shapes=[pltpu.VMEM((B, HW), jnp.float32)],
        compiler_params=pltpu.CompilerParams(
            dimension_semantics=("arbitrary",),     # channel axis is a reduction
            vmem_limit_bytes=vmem_limit_bytes,
        ),
        cost_estimate=cost,
    )(feat_flat, w2d)

    # x[0] + x[1].flip(-1): done in the wrapper on the tiny (H, W) CAM maps.
    cams = cams_flat.reshape(B, H, W)
    return cams[0:1] + cams[1:2, :, ::-1]


# ----------------------------- Backbone stand-in (plain JAX glue) -----------
# TODO(synk): resnet50.resnet50(pretrained=True, strides=(2,2,2,1)) is an
# external module whose definition / checkpoint are not provided; the backbone
# below is a deterministic, simplified conv stack that reproduces the stage
# strides (conv1 s2 -> maxpool s2 -> s2 -> s2 -> s1, i.e. 16x downsampling) so
# the Pallas CAM-head kernel sees a stage-4-shaped feature map.
def _conv(x, w, stride, pad):
    return lax.conv_general_dilated(
        x, w, window_strides=(stride, stride),
        padding=[(pad, pad), (pad, pad)],
        dimension_numbers=("NCHW", "OIHW", "NCHW"))


def _maxpool_3x3_s2(x):
    return lax.reduce_window(
        x, -jnp.inf, lax.max,
        window_dimensions=(1, 1, 3, 3), window_strides=(1, 1, 2, 2),
        padding=[(0, 0), (0, 0), (1, 1), (1, 1)])


def make_backbone_params(key, c_feat):
    k1, k2, k3, k4 = jax.random.split(key, 4)

    def he(k, shape):
        fan_in = shape[1] * shape[2] * shape[3]
        return jax.random.normal(k, shape, jnp.float32) * jnp.sqrt(2.0 / fan_in)

    return {
        "w1": he(k1, (16, 3, 7, 7)),        # stage1: conv1 (stride 2)
        "w2": he(k2, (32, 16, 3, 3)),       # stage2 (stride 2)
        "w3": he(k3, (64, 32, 3, 3)),       # stage3 (stride 2)
        "w4": he(k4, (c_feat, 64, 3, 3)),   # stage4 (stride 1)
    }


def backbone(params, x):
    x = jax.nn.relu(_conv(x, params["w1"], 2, 3))   # stage1 conv
    x = _maxpool_3x3_s2(x)                          # stage1 maxpool
    x = jax.nn.relu(_conv(x, params["w2"], 2, 1))   # stage2
    x = jax.nn.relu(_conv(x, params["w3"], 2, 1))   # stage3
    x = jax.nn.relu(_conv(x, params["w4"], 1, 1))   # stage4
    return x


# ----------------------------- main ------------------------------------------
if __name__ == "__main__":
    key = jax.random.PRNGKey(0)
    k_x, k_bb, k_cls = jax.random.split(key, 3)

    C_FEAT = 256                                     # stand-in for 2048
    x = jax.random.normal(k_x, (2, 3, 256, 256), jnp.float32)   # NCHW images

    bb_params = make_backbone_params(k_bb, C_FEAT)
    # classifier = nn.Conv2d(C_FEAT, 1, 1, bias=False), kaiming_normal_ init.
    cls_weight = (jax.random.normal(k_cls, (1, C_FEAT, 1, 1), jnp.float32)
                  * jnp.sqrt(2.0 / C_FEAT))

    feat = backbone(bb_params, x)                    # (2, C_FEAT, 16, 16)

    # Feed the CAM head in bf16 on ALL generations (v5e included): halves HBM
    # bytes on a purely bandwidth-bound kernel; the MXU accumulates in f32 and
    # the wrapper does NOT upcast.
    feat_bf16 = feat.astype(jnp.bfloat16)

    # Auto tile picker: C_FEAT=256 -> TILE_C=128 -> 2 grid steps, exercising
    # the multi-step pipelined (init / accumulate / finalize) path.  At real
    # CAM shapes (C=2048, HW ~ 784-16K) it picks the largest 128-multiple slab
    # whose double-buffered feature block stays within the per-generation VMEM
    # budget granted via vmem_limit_bytes.
    out = cam_head(feat_bf16, cls_weight)            # (1, 16, 16) Pallas
    out = jax.block_until_ready(out)

    # Pure-JAX reference of the CAM head (same bf16 inputs, exact f32 math).
    feat_f32 = feat_bf16.astype(jnp.float32)
    w_f32 = cls_weight[:, :, 0, 0].astype(jnp.bfloat16).astype(jnp.float32)
    cams = jnp.einsum("bchw,oc->bohw", feat_f32, w_f32,
                      precision=lax.Precision.HIGHEST)
    cams = jnp.maximum(cams, 0.0)
    ref = cams[0] + cams[1][:, :, ::-1]              # (1, H, W)

    np.testing.assert_allclose(np.asarray(out), np.asarray(ref),
                               rtol=1e-3, atol=1e-3)
    print("KERNEL_OK")
</pallas_src>

<mosaic_0001>
module attributes {stable_mosaic.version = 11 : i64} {
  func.func @cam_head_kernel(%arg0: i32, %arg1: memref<2x128x256xbf16, #tpu.memory_space<vmem>>, %arg2: memref<1x128xbf16, #tpu.memory_space<vmem>>, %arg3: memref<2x256xf32, #tpu.memory_space<vmem>>, %arg4: memref<2x256xf32, #tpu.memory_space<vmem>>) attributes {dimension_semantics = [#tpu.dimension_semantics<arbitrary>], iteration_bounds = array<i64: 2>, scalar_prefetch = 0 : i64, scratch_operands = 1 : i64, tpu.core_type = #tpu.core_type<tc>, window_params = [{transform_indices = @transform_0, window_bounds = array<i64: 2, 128, 256>}, {transform_indices = @transform_1, window_bounds = array<i64: 1, 128>}, {pipeline_mode = #tpu.pipeline_mode<synchronous>, transform_indices = @transform_2, window_bounds = array<i64: 2, 256>}]} {
    %c0_i32 = arith.constant 0 : i32
    %0 = arith.cmpi eq, %arg0, %c0_i32 : i32
    %1 = arith.extui %0 : i1 to i32
    %c0_i32_0 = arith.constant 0 : i32
    %2 = arith.cmpi ne, %1, %c0_i32_0 : i32
    scf.if %2 {
      %cst_17 = arith.constant 0.000000e+00 : f32
      %19 = vector.broadcast %cst_17 : f32 to vector<2x256xf32>
      %c0_18 = arith.constant 0 : index
      %c0_19 = arith.constant 0 : index
      %20 = vector.load %arg4[%c0_18, %c0_19] : memref<2x256xf32, #tpu.memory_space<vmem>>, vector<2x256xf32>
      tpu.vector_store %arg4[%c0_18, %c0_19], %19 {strides = array<i32>} : memref<2x256xf32, #tpu.memory_space<vmem>>, vector<2x256xf32>,
    } else {
    }
    %c0 = arith.constant 0 : index
    %c0_1 = arith.constant 0 : index
    %3 = vector.load %arg2[%c0, %c0_1] : memref<1x128xbf16, #tpu.memory_space<vmem>>, vector<1x128xbf16>
    %c0_2 = arith.constant 0 : index
    %c0_3 = arith.constant 0 : index
    %4 = vector.load %arg4[%c0_2, %c0_3] : memref<2x256xf32, #tpu.memory_space<vmem>>, vector<1x256xf32>
    %c0_4 = arith.constant 0 : index
    %c0_5 = arith.constant 0 : index
    %c0_6 = arith.constant 0 : index
    %5 = vector.load %arg1[%c0_4, %c0_5, %c0_6] : memref<2x128x256xbf16, #tpu.memory_space<vmem>>, vector<1x128x256xbf16>
    %6 = vector.shape_cast %5 : vector<1x128x256xbf16> to vector<128x256xbf16>
    %cst = arith.constant dense<0.000000e+00> : vector<1x256xf32>
    %7 = tpu.matmul %3, %6, %cst {dimension_numbers = #tpu.dot_dimension_numbers<[1], [0], [0], [1], [0, 0, 1, 1], [], []>} : vector<1x128xbf16>, vector<128x256xbf16>, vector<1x256xf32> -> vector<1x256xf32>
    %8 = arith.addf %4, %7 : vector<1x256xf32>
    %c0_7 = arith.constant 0 : index
    %c0_8 = arith.constant 0 : index
    %9 = vector.load %arg4[%c0_7, %c0_8] : memref<2x256xf32, #tpu.memory_space<vmem>>, vector<1x256xf32>
    tpu.vector_store %arg4[%c0_7, %c0_8], %8 {strides = array<i32>} : memref<2x256xf32, #tpu.memory_space<vmem>>, vector<1x256xf32>,
    %c1 = arith.constant 1 : index
    %c0_9 = arith.constant 0 : index
    %10 = vector.load %arg4[%c1, %c0_9] : memref<2x256xf32, #tpu.memory_space<vmem>>, vector<1x256xf32>
    %c1_10 = arith.constant 1 : index
    %c0_11 = arith.constant 0 : index
    %c0_12 = arith.constant 0 : index
    %11 = vector.load %arg1[%c1_10, %c0_11, %c0_12] : memref<2x128x256xbf16, #tpu.memory_space<vmem>>, vector<1x128x256xbf16>
    %12 = vector.shape_cast %11 : vector<1x128x256xbf16> to vector<128x256xbf16>
    %cst_13 = arith.constant dense<0.000000e+00> : vector<1x256xf32>
    %13 = tpu.matmul %3, %12, %cst_13 {dimension_numbers = #tpu.dot_dimension_numbers<[1], [0], [0], [1], [0, 0, 1, 1], [], []>} : vector<1x128xbf16>, vector<128x256xbf16>, vector<1x256xf32> -> vector<1x256xf32>
    %14 = arith.addf %10, %13 : vector<1x256xf32>
    %c1_14 = arith.constant 1 : index
    %c0_15 = arith.constant 0 : index
    %15 = vector.load %arg4[%c1_14, %c0_15] : memref<2x256xf32, #tpu.memory_space<vmem>>, vector<1x256xf32>
    tpu.vector_store %arg4[%c1_14, %c0_15], %14 {strides = array<i32>} : memref<2x256xf32, #tpu.memory_space<vmem>>, vector<1x256xf32>,
    %c1_i32 = arith.constant 1 : i32
    %16 = arith.cmpi eq, %arg0, %c1_i32 : i32
    %17 = arith.extui %16 : i1 to i32
    %c0_i32_16 = arith.constant 0 : i32
    %18 = arith.cmpi ne, %17, %c0_i32_16 : i32
    scf.if %18 {
      %c0_17 = arith.constant 0 : index
      %c0_18 = arith.constant 0 : index
      %19 = vector.load %arg4[%c0_17, %c0_18] : memref<2x256xf32, #tpu.memory_space<vmem>>, vector<2x256xf32>
      %cst_19 = arith.constant 0.000000e+00 : f32
      %20 = vector.broadcast %cst_19 : f32 to vector<2x256xf32>
      %21 = arith.maximumf %19, %20 : vector<2x256xf32>
      %c0_20 = arith.constant 0 : index
      %c0_21 = arith.constant 0 : index
      %22 = vector.load %arg3[%c0_20, %c0_21] : memref<2x256xf32, #tpu.memory_space<vmem>>, vector<2x256xf32>
      tpu.vector_store %arg3[%c0_20, %c0_21], %21 {strides = array<i32>} : memref<2x256xf32, #tpu.memory_space<vmem>>, vector<2x256xf32>,
    } else {
    }
    return
  }
  func.func @transform_0(%arg0: i32) -> (i32, i32, i32) {
    %c0_i32 = arith.constant 0 : i32
    %c0_i32_0 = arith.constant 0 : i32
    %c0_i32_1 = arith.constant 0 : i32
    return %c0_i32, %arg0, %c0_i32_0 : i32, i32, i32
  }
  func.func @transform_1(%arg0: i32) -> (i32, i32) {
    %c0_i32 = arith.constant 0 : i32
    %c0_i32_0 = arith.constant 0 : i32
    return %c0_i32, %arg0 : i32, i32
  }
  func.func @transform_2(%arg0: i32) -> (i32, i32) {
    %c0_i32 = arith.constant 0 : i32
    %c0_i32_0 = arith.constant 0 : i32
    %c0_i32_1 = arith.constant 0 : i32
    return %c0_i32, %c0_i32_0 : i32, i32
  }
}

</mosaic_0001>

<llo_original>
// kernel: tpu_custom_call.1
$region0: #{tpu_custom_call.1}
  #allocation0 [shape = 'u32[]', space=smem, size = 0x4, offset = 0x4, fixed_abs, tag = 'smem constant byte address 0x4 - core index']
  #allocation1 [shape = 'u32[144,128]{1,0:T(1,128)}', space=vmem, size = 0x12000, scoped, tag = 'internal scratch']
  #allocation2 [shape = 'f32[2,256]{1,0:T(2,128)}', space=vmem, size = 0x800, scoped, tag = 'scratch operand']
  #allocation9 [shape = 's32[]', space=sflag, size = 0x4, offset = 0, fixed_abs, tag = 'sflag constant byte address 0x0 - dummy sync flag']
  %s0 = inlined_call_operand.hbm [shape: bf16[2,256,256], index: 0, kind: input, shape index: {}]
  %s1 = inlined_call_operand.hbm [shape: bf16[1,256], index: 1, kind: input, shape index: {}]
  %s2 = inlined_call_operand.hbm [shape: f32[2,256], index: 2, kind: output, shape index: {}]
  %s3 = sld [smem:[#allocation0]]
  $region57: #{tpu_custom_call.1} parent=0
    _
  %s5 = ssub.s32 1, %s3
  %s6 = scalar_select 0, %s5, %s3
  $region1: #{tpu_custom_call.1} parent=0
    #allocation3 [shape = 'u8[262144]{0}', space=vmem, size = 0x40000, scoped, tag = 'input window, operand 0']
    #allocation4 [shape = 's32[2]{0}', space=sflag, size = 0x8, scoped, tag = 'scoped memory for tpu_custom_call.1']
    #allocation5 [shape = 's32[2]{0}', space=sflag, size = 0x8, scoped, tag = 'scoped memory for tpu_custom_call.1']
    #allocation6 [shape = 'u8[1024]{0}', space=vmem, size = 0x400, scoped, tag = 'input window, operand 1']
    #allocation7 [shape = 's32[2]{0}', space=sflag, size = 0x8, scoped, tag = 'scoped memory for tpu_custom_call.1']
    #allocation8 [shape = 'u8[2048]{0}', space=vmem, size = 0x800, scoped, tag = 'output window, operand 0, single buffered']
    %7 = vsyncpa [#allocation4], 0
    %s8 = scalar_lea.sflag [#allocation4], 1
    %9 = vsyncpa %s8, 0
    %10 = vsyncpa [#allocation7], 0
    %s11 = scalar_lea.sflag [#allocation7], 1
    %12 = vsyncpa %s11, 0
    %13 = vsyncpa [#allocation5], 0
    loop: start=0, step=1, limit=4
    $region2: #{tpu_custom_call.1} parent=1 // loop_pre_header
      _
    $region3: #{tpu_custom_call.1} parent=1 // loop_header
      %s15 = sphi 0, %s19
      %p16 = scmp.ge.s32.totalorder %s15, 4
      %s25 = sphi 0, %s27
      %s28 = sphi 0, %s25
      %s29 = sphi 0, %s28
      %s45 = sphi 0, %s29
      %s51 = sphi 0, %s53
      %s54 = sphi 0, %s51
      %s55 = sphi 0, %s54
      %s71 = sphi 0, %s55
      %s75 = sphi 0, %s75
      %s77 = sphi 0, %s75
      %s78 = sphi 0, %s77
      %s92 = sphi 0, %s78
    $region4: #{tpu_custom_call.1} parent=1 // loop_header_branch
      %18 = sbr.rel (%p16) target = $region8
    $region5: #{tpu_custom_call.1} parent=1 // loop_body
      %s20 = ssub.s32 %s15, 1
      %s21 = ssub.s32 %s15, 2
      %s22 = sadd.s32 %s15, 1
      %s23 = ssub.s32 %s15, %s22
      %p24 = scmp.eq.s32.totalorder %s23, 0
      %s26 = sadd.s32 %s25, 1
      %s27 = scalar_select %p24, %s25, %s26
      %p30 = pneg %p24
      %p31 = scmp.eq.s32.totalorder %s15, 1
      %p32 = por %p30, %p31
      %p33 = scmp.ne.s32.totalorder %s25, %s28
      %p34 = scmp.eq.s32.totalorder %s15, 0
      %p35 = por %p33, %p34
      %p36 = scmp.ne.s32.totalorder %s25, %s28
      %p37 = scmp.eq.s32.totalorder %s20, 1
      %p38 = por %p36, %p37
      %p39 = scmp.ne.s32.totalorder %s28, %s29
      %p40 = scmp.eq.s32.totalorder %s20, 0
      %p41 = por %p39, %p40
      %p42 = scmp.ne.s32.totalorder %s28, %s29
      %p43 = scmp.eq.s32.totalorder %s21, 1
      %p44 = por %p42, %p43
      %p46 = scmp.ne.s32.totalorder %s29, %s45
      %p47 = scmp.eq.s32.totalorder %s21, 0
      %p48 = por %p46, %p47
      %s49 = ssub.s32 %s15, %s22
      %p50 = scmp.eq.s32.totalorder %s49, 0
      %s52 = sadd.s32 %s51, 1
      %s53 = scalar_select %p50, %s51, %s52
      %p56 = pneg %p50
      %p57 = scmp.eq.s32.totalorder %s15, 1
      %p58 = por %p56, %p57
      %p59 = scmp.ne.s32.totalorder %s51, %s54
      %p60 = scmp.eq.s32.totalorder %s15, 0
      %p61 = por %p59, %p60
      %p62 = scmp.ne.s32.totalorder %s51, %s54
      %p63 = scmp.eq.s32.totalorder %s20, 1
      %p64 = por %p62, %p63
      %p65 = scmp.ne.s32.totalorder %s54, %s55
      %p66 = scmp.eq.s32.totalorder %s20, 0
      %p67 = por %p65, %p66
      %p68 = scmp.ne.s32.totalorder %s54, %s55
      %p69 = scmp.eq.s32.totalorder %s21, 1
      %p70 = por %p68, %p69
      %p72 = scmp.ne.s32.totalorder %s55, %s71
      %p73 = scmp.eq.s32.totalorder %s21, 0
      %p74 = por %p72, %p73
      %s76 = sadd.s32 %s75, 1
      %p79 = scmp.eq.s32.totalorder %s15, 1
      %p80 = scmp.ne.s32.totalorder %s75, %s77
      %p81 = scmp.eq.s32.totalorder %s15, 0
      %p82 = por %p80, %p81
      %p83 = scmp.ne.s32.totalorder %s75, %s77
      %p84 = scmp.eq.s32.totalorder %s20, 1
      %p85 = por %p83, %p84
      %p86 = scmp.ne.s32.totalorder %s77, %s78
      %p87 = scmp.eq.s32.totalorder %s20, 0
      %p88 = por %p86, %p87
      %p89 = scmp.ne.s32.totalorder %s77, %s78
      %p90 = scmp.eq.s32.totalorder %s21, 1
      %p91 = por %p89, %p90
      %p93 = scmp.ne.s32.totalorder %s78, %s92
      %p94 = scmp.eq.s32.totalorder %s21, 0
      %p95 = por %p93, %p94
      %p96 = scmp.le.s32.totalorder 1, %s15
      %p97 = scmp.lt.s32.totalorder %s15, 3
      %p98 = pnand %p96, %p97
      %p99 = pneg %p98
      // Predicated region
      $region9: #{tpu_custom_call.1} parent=5 // pred_check
        _
      $region10: #{tpu_custom_call.1} parent=5 // pred_check_branch
        %101 = sbr.rel (%p98) target = $region12
      $region11: #{tpu_custom_call.1} parent=5 // pred_region
        %s102 = ssub.s32 %s15, 1
      $region12: #{tpu_custom_call.1} parent=5 // pred_fallthru
        _
      %p103 = scmp.lt.s32.totalorder %s15, 2
      // Predicated region
      $region13: #{tpu_custom_call.1} parent=5 // pred_check
        %p104 = pneg %p103
      $region14: #{tpu_custom_call.1} parent=5 // pred_check_branch
        %106 = sbr.rel (%p104) target = $region16
      $region15: #{tpu_custom_call.1} parent=5 // pred_region
        // Predicated region
        $region17: #{tpu_custom_call.1} parent=15 // pred_check
          %p107 = pneg %p35
        $region18: #{tpu_custom_call.1} parent=15 // pred_check_branch
          %109 = sbr.rel (%p107) target = $region20
        $region19: #{tpu_custom_call.1} parent=15 // pred_region
          #allocation10 [shape = 'u32[6]{0}', space=smem, size = 0x18, scoped, tag = 'DMA stride descriptor']
          %s110 = sand.u32 %s25, 1
          %s111 = scalar_lea.sflag [#allocation4], %s110
          %s112 = sand.u32 %s25, 1
          %s113 = smul.addr %s112, 256
          %s114 = scalar_lea.vmem [#allocation3], %s113
          %s115 = smul.u32 16, %s15
          %s117 = ssub.s32 4096, 4096
          %118 = vsyncadd %s111, %s117
          %s119 = smul.addr %s115, 2
          %s120 = smul.addr %s119, 64
          %s121 = scalar_lea.hbm %s0, %s120
          %s123 = sshll.u32 1, 14
          %s124 = sxor.u32 4294967295, %s123
          %s126 = sld [smem:[#allocation0]]
          %s127 = sadd.s32 2, %s126
          %s129 = sshll.u32 7, 26
          %s130 = sxor.u32 4294967295, %s129
          %s131 = sand.u32 0, %s130
          %s132 = sshll.u32 %s127, 26
          %s133 = sor.u32 %s131, %s132
          %s134 = sshll.u32 %s114, 4
          %s135 = int_to_ptr.vmem [resolvable:$true] %s134
          %141 = sst [smem:[#allocation10]] 4096
          %s142 = scalar_lea.smem [#allocation10], 1
          %143 = sst [smem:[%s142]] 2048
          %s144 = scalar_lea.smem [#allocation10], 2
          %145 = sst [smem:[%s144]] 16
          %s146 = scalar_lea.smem [#allocation10], 3
          %147 = sst [smem:[%s146]] 128
          %s148 = scalar_lea.smem [#allocation10], 4
          %149 = sst [smem:[%s148]] 128
          %s150 = scalar_lea.smem [#allocation10], 5
          %151 = sst [smem:[%s150]] 8
          %153 = dma.general %s121, 4096, %s135, %s111, 131072, [#allocation10], %s133, 0
        $region20: #{tpu_custom_call.1} parent=15 // pred_fallthru
          _
        // Predicated region
        $region21: #{tpu_custom_call.1} parent=15 // pred_check
          %p154 = pneg %p61
        $region22: #{tpu_custom_call.1} parent=15 // pred_check_branch
          %156 = sbr.rel (%p154) target = $region24
        $region23: #{tpu_custom_call.1} parent=15 // pred_region
          %s157 = sand.u32 %s51, 1
          %s158 = scalar_lea.sflag [#allocation7], %s157
          %s159 = sand.u32 %s51, 1
          %s160 = scalar_lea.vmem [#allocation6], %s159
          %s162 = ssub.s32 16, 16
          %163 = vsyncadd %s158, %s162
          %s164 = smul.addr %s15, 16
          %s165 = scalar_lea.hbm %s1, %s164
          %s167 = sshll.u32 %s160, 4
          %s168 = int_to_ptr.vmem [resolvable:$true] %s167
          %170 = dma.hbm_to_vmem [thread:$0]  %s165, 16, %s168, %s158
        $region24: #{tpu_custom_call.1} parent=15 // pred_fallthru
          _
      $region16: #{tpu_custom_call.1} parent=5 // pred_fallthru
        _
      %p171 = scmp.le.s32.totalorder 1, %s15
      %p172 = scmp.lt.s32.totalorder %s15, 3
      %p173 = pnand %p171, %p172
      %p174 = pneg %p173
      // Predicated region
      $region25: #{tpu_custom_call.1} parent=5 // pred_check
        _
      $region26: #{tpu_custom_call.1} parent=5 // pred_check_branch
        %176 = sbr.rel (%p173) target = $region28
      $region27: #{tpu_custom_call.1} parent=5 // pred_region
        %s177 = ssub.s32 %s15, 1
        %s178 = sand.u32 %s28, 1
        %s179 = scalar_lea.sflag [#allocation4], %s178
        %s180 = sand.u32 %s28, 1
        %s181 = smul.addr %s180, 256
        %s182 = scalar_lea.vmem [#allocation3], %s181
        // Predicated region
        $region29: #{tpu_custom_call.1} parent=27 // pred_check
          %p183 = pneg %p41
        $region30: #{tpu_custom_call.1} parent=27 // pred_check_branch
          %185 = sbr.rel (%p183) target = $region32
        $region31: #{tpu_custom_call.1} parent=27 // pred_region
          %186 = dma.done %s179, 4096
        $region32: #{tpu_custom_call.1} parent=27 // pred_fallthru
          _
        %s187 = sand.u32 %s54, 1
        %s188 = scalar_lea.sflag [#allocation7], %s187
        %s189 = sand.u32 %s54, 1
        %s190 = scalar_lea.vmem [#allocation6], %s189
        // Predicated region
        $region33: #{tpu_custom_call.1} parent=27 // pred_check
          %p191 = pneg %p67
        $region34: #{tpu_custom_call.1} parent=27 // pred_check_branch
          %193 = sbr.rel (%p191) target = $region36
        $region35: #{tpu_custom_call.1} parent=27 // pred_region
          %194 = dma.done %s188, 16
        $region36: #{tpu_custom_call.1} parent=27 // pred_fallthru
          _
        %s195 = sand.u32 %s28, 1
        %s196 = scalar_lea.sflag [#allocation4], %s195
        %s197 = sand.u32 %s28, 1
        %s198 = smul.addr %s197, 256
        %s199 = scalar_lea.vmem [#allocation3], %s198
        %p200 = pneg %p41
        %p201 = pneg %p38
        %s202 = sand.u32 %s54, 1
        %s203 = scalar_lea.sflag [#allocation7], %s202
        %s204 = sand.u32 %s54, 1
        %s205 = scalar_lea.vmem [#allocation6], %s204
        %p206 = pneg %p67
        %p207 = pneg %p64
        %p208 = pneg %p88
        %p209 = pneg %p85
        %s210 = smul.u32 16, %s20
        %p212 = scmp.eq.s32.totalorder %s20, 0
        // Predicated region
        $region37: #{tpu_custom_call.1} parent=27 // pred_check
          %p213 = pneg %p212
        $region38: #{tpu_custom_call.1} parent=27 // pred_check_branch
          %215 = sbr.rel (%p213) target = $region40
        $region39: #{tpu_custom_call.1} parent=27 // pred_region
          %216 = vst [vmem:[#allocation2] sm:$0xf] 0.0
        $region40: #{tpu_custom_call.1} parent=27 // pred_fallthru
          _
        %v217 = vld [vmem:[%s190] sm:$0x1]
        %v218 = vld [vmem:[#allocation2] ss:$2 sm:$0x3]
        %v219 = vld [vmem:[%s182] sm:$0xff]
        %v220 = vld [vmem:[%s182 + $0x8] sm:$0xff]
        %v221 = vld [vmem:[%s182 + $0x10] sm:$0xff]
        %v222 = vld [vmem:[%s182 + $0x18] sm:$0xff]
        %v223 = vld [vmem:[%s182 + $0x20] sm:$0xff]
        %v224 = vld [vmem:[%s182 + $0x28] sm:$0xff]
        %v225 = vld [vmem:[%s182 + $0x30] sm:$0xff]
        %v226 = vld [vmem:[%s182 + $0x38] sm:$0xff]
        %v227 = vld [vmem:[%s182 + $0x40] sm:$0xff]
        %v228 = vld [vmem:[%s182 + $0x48] sm:$0xff]
        %v229 = vld [vmem:[%s182 + $0x50] sm:$0xff]
        %v230 = vld [vmem:[%s182 + $0x58] sm:$0xff]
        %v231 = vld [vmem:[%s182 + $0x60] sm:$0xff]
        %v232 = vld [vmem:[%s182 + $0x68] sm:$0xff]
        %v233 = vld [vmem:[%s182 + $0x70] sm:$0xff]
        %v234 = vld [vmem:[%s182 + $0x78] sm:$0xff]
        %v251 = vunpack.c.l.b16 %v219
        %v252 = vunpack.c.h.b16 %v219
        %v253 = vunpack.c.l.b16 %v220
        %v254 = vunpack.c.h.b16 %v220
        %v255 = vunpack.c.l.b16 %v221
        %v256 = vunpack.c.h.b16 %v221
        %v257 = vunpack.c.l.b16 %v222
        %v258 = vunpack.c.h.b16 %v222
        %v259 = vunpack.c.l.b16 %v223
        %v260 = vunpack.c.h.b16 %v223
        %v261 = vunpack.c.l.b16 %v224
        %v262 = vunpack.c.h.b16 %v224
        %v263 = vunpack.c.l.b16 %v225
        %v264 = vunpack.c.h.b16 %v225
        %v265 = vunpack.c.l.b16 %v226
        %v266 = vunpack.c.h.b16 %v226
        %v267 = vunpack.c.l.b16 %v227
        %v268 = vunpack.c.h.b16 %v227
        %v269 = vunpack.c.l.b16 %v228
        %v270 = vunpack.c.h.b16 %v228
        %v271 = vunpack.c.l.b16 %v229
        %v272 = vunpack.c.h.b16 %v229
        %v273 = vunpack.c.l.b16 %v230
        %v274 = vunpack.c.h.b16 %v230
        %v275 = vunpack.c.l.b16 %v231
        %v276 = vunpack.c.h.b16 %v231
        %v277 = vunpack.c.l.b16 %v232
        %v278 = vunpack.c.h.b16 %v232
        %v279 = vunpack.c.l.b16 %v233
        %v280 = vunpack.c.h.b16 %v233
        %v281 = vunpack.c.l.b16 %v234
        %v282 = vunpack.c.h.b16 %v234
        %v283 = vpack.c.b16 %v253, %v251
        %v284 = vpack.c.b16 %v254, %v252
        %v285 = vpack.c.b16 %v257, %v255
        %v286 = vpack.c.b16 %v258, %v256
        %v287 = vpack.c.b16 %v261, %v259
        %v288 = vpack.c.b16 %v262, %v260
        %v289 = vpack.c.b16 %v265, %v263
        %v290 = vpack.c.b16 %v266, %v264
        %v291 = vpack.c.b16 %v269, %v267
        %v292 = vpack.c.b16 %v270, %v268
        %v293 = vpack.c.b16 %v273, %v271
        %v294 = vpack.c.b16 %v274, %v272
        %v295 = vpack.c.b16 %v277, %v275
        %v296 = vpack.c.b16 %v278, %v276
        %v297 = vpack.c.b16 %v281, %v279
        %v298 = vpack.c.b16 %v282, %v280
        %315 = vmatprep.subr.bf16.mxu0 %v298
        %316 = vmatpush1.bf16.msra.mxu0 %v297
        %317 = vmatprep.subr.bf16.mxu0 %v296
        %318 = vmatpush1.bf16.msra.mxu0 %v295
        %319 = vmatprep.subr.bf16.mxu0 %v294
        %320 = vmatpush1.bf16.msra.mxu0 %v293
        %321 = vmatprep.subr.bf16.mxu0 %v292
        %322 = vmatpush1.bf16.msra.mxu0 %v291
        %323 = vmatprep.subr.bf16.mxu0 %v290
        %324 = vmatpush1.bf16.msra.mxu0 %v289
        %325 = vmatprep.subr.bf16.mxu0 %v288
        %326 = vmatpush1.bf16.msra.mxu0 %v287
        %327 = vmatprep.subr.bf16.mxu0 %v286
        %328 = vmatpush1.bf16.msra.mxu0 %v285
        %329 = vmatprep.subr.bf16.mxu0 %v284
        %330 = vmatpush1.bf16.msra.mxu0 %v283
        %331 = vmatprep.subr.bf16.mxu0 0
        %332 = vmatpush2.bf16.msra.mxu0 0
        %333 = vmatprep.subr.bf16.mxu0 0
        %334 = vmatpush2.bf16.msra.mxu0 0
        %335 = vmatprep.subr.bf16.mxu0 0
        %336 = vmatpush2.bf16.msra.mxu0 0
        %337 = vmatprep.subr.bf16.mxu0 0
        %338 = vmatpush2.bf16.msra.mxu0 0
        %339 = vmatprep.subr.bf16.mxu0 0
        %340 = vmatpush2.bf16.msra.mxu0 0
        %341 = vmatprep.subr.bf16.mxu0 0
        %342 = vmatpush2.bf16.msra.mxu0 0
        %343 = vmatprep.subr.bf16.mxu0 0
        %344 = vmatpush2.bf16.msra.mxu0 0
        %345 = vmatprep.subr.bf16.mxu0 0
        %346 = vmatpush2.bf16.msra.mxu0 0
        %347 = vmatprep.mubr.bf16.mxu0 0
        %348 = vmatmul.mubr.bf16.gmra.mxu0 %v217
        %v349 = vpop.f32.mrf.mxu0
        %v350 = vadd.f32 0.0, %v349
        %v351 = vpop.f32.mrf.mxu0
        %v352 = vadd.f32 0.0, %v351
        %v353 = vpop.f32.mrf.mxu0
        %v354 = vpop.f32.mrf.mxu0
        %355 = vdwg.mxu0
        %v358 = vcombine.low %v350, %v352
        %v360 = vunpack.c.l.s4 1966171168
        %v361 = vunpack.c.0.s8 %v360
        %v362 = vlaneseq
        %v363 = vshrl.u32 %v362, 7
        %v364 = vsub.s32 %v361, %v363
        %v365 = vrot.slane %v358, %v364
        %v367 = vunpack.c.l.s4 1966171168
        %v368 = vunpack.c.0.s8 %v367
        %v369 = vlaneseq
        %v370 = vshrl.u32 %v369, 7
        %v371 = vsub.s32 %v368, %v370
        %v372 = vrot.slane %v365, %v371
        %v374 = vadd.f32 %v218, %v372
        %v375 = vlaneseq
        %vm376 = vcmp.ge.s32.totalorder %v375, 0
        %vm377 = vcmp.lt.s32.totalorder %v375, 256
        %vm378 = vmand %vm376, %vm377
        %379 = vst.msk [vmem:[#allocation2] ss:$2 sm:$0x3] %vm378, %v374
        %s380 = scalar_lea.vmem [#allocation2], 1
        %v381 = vld [vmem:[%s380] ss:$2 sm:$0x3]
        %s382 = scalar_lea.vmem %s182, 128 [#allocation3]
        %v383 = vld [vmem:[%s382] sm:$0xff]
        %v384 = vld [vmem:[%s382 + $0x8] sm:$0xff]
        %v385 = vld [vmem:[%s382 + $0x10] sm:$0xff]
        %v386 = vld [vmem:[%s382 + $0x18] sm:$0xff]
        %v387 = vld [vmem:[%s382 + $0x20] sm:$0xff]
        %v388 = vld [vmem:[%s382 + $0x28] sm:$0xff]
        %v389 = vld [vmem:[%s382 + $0x30] sm:$0xff]
        %v390 = vld [vmem:[%s382 + $0x38] sm:$0xff]
        %v391 = vld [vmem:[%s382 + $0x40] sm:$0xff]
        %v392 = vld [vmem:[%s382 + $0x48] sm:$0xff]
        %v393 = vld [vmem:[%s382 + $0x50] sm:$0xff]
        %v394 = vld [vmem:[%s382 + $0x58] sm:$0xff]
        %v395 = vld [vmem:[%s382 + $0x60] sm:$0xff]
        %v396 = vld [vmem:[%s382 + $0x68] sm:$0xff]
        %v397 = vld [vmem:[%s382 + $0x70] sm:$0xff]
        %v398 = vld [vmem:[%s382 + $0x78] sm:$0xff]
        %v415 = vunpack.c.l.b16 %v383
        %v416 = vunpack.c.h.b16 %v383
        %v417 = vunpack.c.l.b16 %v384
        %v418 = vunpack.c.h.b16 %v384
        %v419 = vunpack.c.l.b16 %v385
        %v420 = vunpack.c.h.b16 %v385
        %v421 = vunpack.c.l.b16 %v386
        %v422 = vunpack.c.h.b16 %v386
        %v423 = vunpack.c.l.b16 %v387
        %v424 = vunpack.c.h.b16 %v387
        %v425 = vunpack.c.l.b16 %v388
        %v426 = vunpack.c.h.b16 %v388
        %v427 = vunpack.c.l.b16 %v389
        %v428 = vunpack.c.h.b16 %v389
        %v429 = vunpack.c.l.b16 %v390
        %v430 = vunpack.c.h.b16 %v390
        %v431 = vunpack.c.l.b16 %v391
        %v432 = vunpack.c.h.b16 %v391
        %v433 = vunpack.c.l.b16 %v392
        %v434 = vunpack.c.h.b16 %v392
        %v435 = vunpack.c.l.b16 %v393
        %v436 = vunpack.c.h.b16 %v393
        %v437 = vunpack.c.l.b16 %v394
        %v438 = vunpack.c.h.b16 %v394
        %v439 = vunpack.c.l.b16 %v395
        %v440 = vunpack.c.h.b16 %v395
        %v441 = vunpack.c.l.b16 %v396
        %v442 = vunpack.c.h.b16 %v396
        %v443 = vunpack.c.l.b16 %v397
        %v444 = vunpack.c.h.b16 %v397
        %v445 = vunpack.c.l.b16 %v398
        %v446 = vunpack.c.h.b16 %v398
        %v447 = vpack.c.b16 %v417, %v415
        %v448 = vpack.c.b16 %v418, %v416
        %v449 = vpack.c.b16 %v421, %v419
        %v450 = vpack.c.b16 %v422, %v420
        %v451 = vpack.c.b16 %v425, %v423
        %v452 = vpack.c.b16 %v426, %v424
        %v453 = vpack.c.b16 %v429, %v427
        %v454 = vpack.c.b16 %v430, %v428
        %v455 = vpack.c.b16 %v433, %v431
        %v456 = vpack.c.b16 %v434, %v432
        %v457 = vpack.c.b16 %v437, %v435
        %v458 = vpack.c.b16 %v438, %v436
        %v459 = vpack.c.b16 %v441, %v439
        %v460 = vpack.c.b16 %v442, %v440
        %v461 = vpack.c.b16 %v445, %v443
        %v462 = vpack.c.b16 %v446, %v444
        %479 = vmatprep.subr.bf16.mxu0 %v462
        %480 = vmatpush1.bf16.msra.mxu0 %v461
        %481 = vmatprep.subr.bf16.mxu0 %v460
        %482 = vmatpush1.bf16.msra.mxu0 %v459
        %483 = vmatprep.subr.bf16.mxu0 %v458
        %484 = vmatpush1.bf16.msra.mxu0 %v457
        %485 = vmatprep.subr.bf16.mxu0 %v456
        %486 = vmatpush1.bf16.msra.mxu0 %v455
        %487 = vmatprep.subr.bf16.mxu0 %v454
        %488 = vmatpush1.bf16.msra.mxu0 %v453
        %489 = vmatprep.subr.bf16.mxu0 %v452
        %490 = vmatpush1.bf16.msra.mxu0 %v451
        %491 = vmatprep.subr.bf16.mxu0 %v450
        %492 = vmatpush1.bf16.msra.mxu0 %v449
        %493 = vmatprep.subr.bf16.mxu0 %v448
        %494 = vmatpush1.bf16.msra.mxu0 %v447
        %495 = vmatprep.subr.bf16.mxu0 0
        %496 = vmatpush2.bf16.msra.mxu0 0
        %497 = vmatprep.subr.bf16.mxu0 0
        %498 = vmatpush2.bf16.msra.mxu0 0
        %499 = vmatprep.subr.bf16.mxu0 0
        %500 = vmatpush2.bf16.msra.mxu0 0
        %501 = vmatprep.subr.bf16.mxu0 0
        %502 = vmatpush2.bf16.msra.mxu0 0
        %503 = vmatprep.subr.bf16.mxu0 0
        %504 = vmatpush2.bf16.msra.mxu0 0
        %505 = vmatprep.subr.bf16.mxu0 0
        %506 = vmatpush2.bf16.msra.mxu0 0
        %507 = vmatprep.subr.bf16.mxu0 0
        %508 = vmatpush2.bf16.msra.mxu0 0
        %509 = vmatprep.subr.bf16.mxu0 0
        %510 = vmatpush2.bf16.msra.mxu0 0
        %511 = vmatprep.mubr.bf16.mxu0 0
        %512 = vmatmul.mubr.bf16.gmra.mxu0 %v217
        %v513 = vpop.f32.mrf.mxu0
        %v514 = vadd.f32 0.0, %v513
        %v515 = vpop.f32.mrf.mxu0
        %v516 = vadd.f32 0.0, %v515
        %v517 = vpop.f32.mrf.mxu0
        %v518 = vpop.f32.mrf.mxu0
        %519 = vdwg.mxu0
        %v522 = vcombine.low %v514, %v516
        %v524 = vunpack.c.l.s4 1966171168
        %v525 = vunpack.c.0.s8 %v524
        %v526 = vlaneseq
        %v527 = vshrl.u32 %v526, 7
        %v528 = vsub.s32 %v525, %v527
        %v529 = vrot.slane %v522, %v528
        %v531 = vunpack.c.l.s4 1966171168
        %v532 = vunpack.c.0.s8 %v531
        %v533 = vlaneseq
        %v534 = vshrl.u32 %v533, 7
        %v535 = vsub.s32 %v532, %v534
        %v536 = vrot.slane %v529, %v535
        %v538 = vadd.f32 %v381, %v536
        %539 = vst.msk [vmem:[%s380] ss:$2 sm:$0x3] %vm378, %v538
        %p540 = scmp.eq.s32.totalorder %s20, 1
        // Predicated region
        $region41: #{tpu_custom_call.1} parent=27 // pred_check
          %p541 = pneg %p540
        $region42: #{tpu_custom_call.1} parent=27 // pred_check_branch
          %543 = sbr.rel (%p541) target = $region44
        $region43: #{tpu_custom_call.1} parent=27 // pred_region
          %v544 = vld [vmem:[#allocation2] sm:$0xf]
          %v545 = vmax.f32 %v544, 0.0
          %546 = vst [vmem:[#allocation8] sm:$0xf] %v545
        $region44: #{tpu_custom_call.1} parent=27 // pred_fallthru
          _
        // Predicated region
        $region45: #{tpu_custom_call.1} parent=27 // pred_check
          %p547 = pneg %p85
        $region46: #{tpu_custom_call.1} parent=27 // pred_check_branch
          %549 = sbr.rel (%p547) target = $region48
        $region47: #{tpu_custom_call.1} parent=27 // pred_region
          %s551 = ssub.s32 64, 64
          %552 = vsyncadd [#allocation5], %s551
          %s554 = sshll.u32 [#allocation8], 4
          %s555 = int_to_ptr.vmem [resolvable:$true] %s554
          %557 = dma.vmem_to_hbm [thread:$0]  %s555, 64, %s2, [#allocation5]
        $region48: #{tpu_custom_call.1} parent=27 // pred_fallthru
          _
        // Predicated region
        $region49: #{tpu_custom_call.1} parent=27 // pred_check
          %p558 = pneg %p85
        $region50: #{tpu_custom_call.1} parent=27 // pred_check_branch
          %560 = sbr.rel (%p558) target = $region52
        $region51: #{tpu_custom_call.1} parent=27 // pred_region
          %561 = dma.done [#allocation5], 64
        $region52: #{tpu_custom_call.1} parent=27 // pred_fallthru
          _
      $region28: #{tpu_custom_call.1} parent=5 // pred_fallthru
        _
      %p562 = scmp.le.s32.totalorder 2, %s15
      // Predicated region
      $region53: #{tpu_custom_call.1} parent=5 // pred_check
        %p563 = pneg %p562
      $region54: #{tpu_custom_call.1} parent=5 // pred_check_branch
        %565 = sbr.rel (%p563) target = $region56
      $region55: #{tpu_custom_call.1} parent=5 // pred_region
        %s566 = ssub.s32 %s15, 2
      $region56: #{tpu_custom_call.1} parent=5 // pred_fallthru
        _
    $region6: #{tpu_custom_call.1} parent=1 // loop_footer
      %s19 = sadd.s32 1, %s15
    $region7: #{tpu_custom_call.1} parent=1 // loop_footer_branch
      %14 = sbr.rel target = $region3
    $region8: #{tpu_custom_call.1} parent=1 // loop_exit
      _
    %567 = vsyncpa [#allocation4], 1
    %s568 = scalar_lea.sflag [#allocation4], 1
    %569 = vsyncpa %s568, 1
    %570 = vsyncpa [#allocation7], 1
    %s571 = scalar_lea.sflag [#allocation7], 1
    %572 = vsyncpa %s571, 1
    %573 = vsyncpa [#allocation5], 1
    %s574 = scalar_lea.sflag [#allocation5], 1
    %575 = vsyncpa %s574, 1

</llo_original>
